<compile_context>
chip_gen: v7x
topology: tpu7x:2x2x1
jax: 0.10.0
libtpu: 0.0.40
codegen_flags: <defaults>
</compile_context>

<pallas_src>
import functools

import jax
import jax.numpy as jnp
from jax import lax
from jax.experimental import pallas as pl
from jax.experimental.pallas import tpu as pltpu

_LANE = 128


def _round_up(x, m):
    return (x + m - 1) // m * m


def _pick_tile_b(B, I, R, vmem_budget_bytes=24 << 20):
    """Largest lane-multiple batch tile whose double-buffered inputs fit VMEM."""
    tile = 1024
    # 2 inputs x 2 pipeline buffers x (I+R) rows x tile lanes x 4 B (+ output tile)
    while tile > _LANE and 2 * 2 * (I + R + 1) * tile * 4 > vmem_budget_bytes:
        tile //= 2
    return max(_LANE, min(tile, _round_up(B, _LANE)))


# TODO(synk): recommendations_loss is abstract in the PyTorch module; a
# deterministic miss-rate per-row loss is used as the concrete implementation.
def _miss_rate_kernel(inter_ref, rec_ref, out_ref, *, n_inter, n_rec):
    """inter_ref: (I, TB) i32, rec_ref: (R, TB) i32, out_ref: (1, TB) f32."""
    rec = rec_ref[...]                                     # (R, TB)
    tb = rec.shape[1]
    zero = jnp.zeros((n_rec, tb), jnp.int32)

    if n_inter <= 64:
        # Short, static interaction count: fully unrolled, static sublane slices.
        hits = zero
        for i in range(n_inter):
            hits = hits + (rec == inter_ref[i:i + 1, :]).astype(jnp.int32)
    else:
        # Large / long interaction lists: visible loop bounds vreg live ranges.
        def body(i, hits):
            row = inter_ref[pl.ds(i, 1), :]                # (1, TB)
            return hits + (rec == row).astype(jnp.int32)
        hits = lax.fori_loop(0, n_inter, body, zero)

    miss = (hits == 0).astype(jnp.float32)                 # (R, TB)
    # Single sublane (XLU) reduce per tile; scale by 1/R on the VPU.
    out_ref[...] = jnp.sum(miss, axis=0, keepdims=True) * (1.0 / n_rec)


def recommendations_aware_loss(interactions, recommendations, *, reduce=True,
                               reduction="mean", tile_b=None):
    assert reduction in ("none", "mean", "sum")
    do_reduce = reduce and reduction != "none"

    interactions = jnp.asarray(interactions, jnp.int32)
    recommendations = jnp.asarray(recommendations, jnp.int32)
    B, I = interactions.shape
    B2, R = recommendations.shape
    assert B == B2

    if tile_b is None:
        tile_b = _pick_tile_b(B, I, R)
    assert tile_b % _LANE == 0

    B_pad = _round_up(B, tile_b)
    # Batch on the lane axis; pad to a tile multiple (padded lanes sliced off later).
    inter_t = jnp.pad(interactions.T, ((0, 0), (0, B_pad - B)))
    rec_t = jnp.pad(recommendations.T, ((0, 0), (0, B_pad - B)), constant_values=-1)

    grid = (B_pad // tile_b,)
    kernel = functools.partial(_miss_rate_kernel, n_inter=I, n_rec=R)

    cost = pl.CostEstimate(
        flops=2 * B_pad * I * R,               # compare + accumulate per (row, slot)
        transcendentals=0,
        bytes_accessed=4 * B_pad * (I + R + 1),
    )

    per_row = pl.pallas_call(
        kernel,
        out_shape=jax.ShapeDtypeStruct((1, B_pad), jnp.float32),
        grid_spec=pltpu.PrefetchScalarGridSpec(
            num_scalar_prefetch=0,
            grid=grid,
            in_specs=[
                pl.BlockSpec((I, tile_b), lambda b: (0, b)),
                pl.BlockSpec((R, tile_b), lambda b: (0, b)),
            ],
            out_specs=pl.BlockSpec((1, tile_b), lambda b: (0, b)),
        ),
        compiler_params=pltpu.CompilerParams(
            dimension_semantics=("parallel",)),
        cost_estimate=cost,
    )(inter_t, rec_t)

    per_row = per_row[0, :B]                   # (B,) per-row loss values
    if not do_reduce:
        return per_row                         # reduction='none'
    s = jnp.sum(per_row)                       # torch.sum(loss_values, dim=0)
    return s / B if reduction == "mean" else s


class RecommendationsAwareLoss:
    """JAX/Pallas port of the PyTorch RecommendationsAwareLoss module."""

    def __init__(self, *, reduce: bool = True, reduction: str = "mean"):
        assert reduction in ("none", "mean", "sum")
        self.reduce = reduce and reduction != "none"
        self.reduction = reduction

    def __call__(self, interactions, recommendations):
        return recommendations_aware_loss(
            interactions, recommendations,
            reduce=self.reduce, reduction=self.reduction)


def _reference(interactions, recommendations, reduction):
    """Pure-JAX reference for correctness checking."""
    hit = jnp.any(recommendations[:, :, None] == interactions[:, None, :], axis=-1)
    loss_values = jnp.mean(1.0 - hit.astype(jnp.float32), axis=-1)  # (B,)
    if reduction == "none":
        return loss_values
    s = jnp.sum(loss_values, axis=0)
    return s / loss_values.shape[0] if reduction == "mean" else s


if __name__ == "__main__":
    key = jax.random.PRNGKey(0)
    k1, k2 = jax.random.split(key)
    B, I, R = 16, 32, 8
    interactions = jax.random.randint(k1, (B, I), 0, 50, dtype=jnp.int32)
    recommendations = jax.random.randint(k2, (B, R), 0, 50, dtype=jnp.int32)

    ok = True
    for reduction in ("mean", "sum", "none"):
        mod = RecommendationsAwareLoss(reduction=reduction)
        out = jax.block_until_ready(mod(interactions, recommendations))
        ref = _reference(interactions, recommendations, reduction)
        ok &= bool(jnp.allclose(out, ref, atol=1e-6))

    if ok:
        print("KERNEL_OK")
</pallas_src>

<mosaic_0001>
module attributes {stable_mosaic.version = 11 : i64} {
  func.func @_miss_rate_kernel(%arg0: i32, %arg1: memref<32x128xi32, #tpu.memory_space<vmem>>, %arg2: memref<8x128xi32, #tpu.memory_space<vmem>>, %arg3: memref<1x128xf32, #tpu.memory_space<vmem>>) attributes {dimension_semantics = [#tpu.dimension_semantics<parallel>], iteration_bounds = array<i64: 1>, scalar_prefetch = 0 : i64, scratch_operands = 0 : i64, tpu.core_type = #tpu.core_type<tc>, window_params = [{transform_indices = @transform_0, window_bounds = array<i64: 32, 128>}, {transform_indices = @transform_1, window_bounds = array<i64: 8, 128>}, {transform_indices = @transform_2, window_bounds = array<i64: 1, 128>}]} {
    %c0 = arith.constant 0 : index
    %c0_0 = arith.constant 0 : index
    %0 = vector.load %arg2[%c0, %c0_0] : memref<8x128xi32, #tpu.memory_space<vmem>>, vector<8x128xi32>
    %c0_i32 = arith.constant 0 : i32
    %1 = vector.broadcast %c0_i32 : i32 to vector<8x128xi32>
    %c0_1 = arith.constant 0 : index
    %c0_2 = arith.constant 0 : index
    %2 = vector.load %arg1[%c0_1, %c0_2] : memref<32x128xi32, #tpu.memory_space<vmem>>, vector<1x128xi32>
    %3 = vector.broadcast %2 : vector<1x128xi32> to vector<8x128xi32>
    %4 = arith.cmpi eq, %0, %3 : vector<8x128xi32>
    %5 = arith.extui %4 : vector<8x128xi1> to vector<8x128xi32>
    %6 = arith.addi %1, %5 : vector<8x128xi32>
    %c1 = arith.constant 1 : index
    %c0_3 = arith.constant 0 : index
    %7 = vector.load %arg1[%c1, %c0_3] : memref<32x128xi32, #tpu.memory_space<vmem>>, vector<1x128xi32>
    %8 = vector.broadcast %7 : vector<1x128xi32> to vector<8x128xi32>
    %9 = arith.cmpi eq, %0, %8 : vector<8x128xi32>
    %10 = arith.extui %9 : vector<8x128xi1> to vector<8x128xi32>
    %11 = arith.addi %6, %10 : vector<8x128xi32>
    %c2 = arith.constant 2 : index
    %c0_4 = arith.constant 0 : index
    %12 = vector.load %arg1[%c2, %c0_4] : memref<32x128xi32, #tpu.memory_space<vmem>>, vector<1x128xi32>
    %13 = vector.broadcast %12 : vector<1x128xi32> to vector<8x128xi32>
    %14 = arith.cmpi eq, %0, %13 : vector<8x128xi32>
    %15 = arith.extui %14 : vector<8x128xi1> to vector<8x128xi32>
    %16 = arith.addi %11, %15 : vector<8x128xi32>
    %c3 = arith.constant 3 : index
    %c0_5 = arith.constant 0 : index
    %17 = vector.load %arg1[%c3, %c0_5] : memref<32x128xi32, #tpu.memory_space<vmem>>, vector<1x128xi32>
    %18 = vector.broadcast %17 : vector<1x128xi32> to vector<8x128xi32>
    %19 = arith.cmpi eq, %0, %18 : vector<8x128xi32>
    %20 = arith.extui %19 : vector<8x128xi1> to vector<8x128xi32>
    %21 = arith.addi %16, %20 : vector<8x128xi32>
    %c4 = arith.constant 4 : index
    %c0_6 = arith.constant 0 : index
    %22 = vector.load %arg1[%c4, %c0_6] : memref<32x128xi32, #tpu.memory_space<vmem>>, vector<1x128xi32>
    %23 = vector.broadcast %22 : vector<1x128xi32> to vector<8x128xi32>
    %24 = arith.cmpi eq, %0, %23 : vector<8x128xi32>
    %25 = arith.extui %24 : vector<8x128xi1> to vector<8x128xi32>
    %26 = arith.addi %21, %25 : vector<8x128xi32>
    %c5 = arith.constant 5 : index
    %c0_7 = arith.constant 0 : index
    %27 = vector.load %arg1[%c5, %c0_7] : memref<32x128xi32, #tpu.memory_space<vmem>>, vector<1x128xi32>
    %28 = vector.broadcast %27 : vector<1x128xi32> to vector<8x128xi32>
    %29 = arith.cmpi eq, %0, %28 : vector<8x128xi32>
    %30 = arith.extui %29 : vector<8x128xi1> to vector<8x128xi32>
    %31 = arith.addi %26, %30 : vector<8x128xi32>
    %c6 = arith.constant 6 : index
    %c0_8 = arith.constant 0 : index
    %32 = vector.load %arg1[%c6, %c0_8] : memref<32x128xi32, #tpu.memory_space<vmem>>, vector<1x128xi32>
    %33 = vector.broadcast %32 : vector<1x128xi32> to vector<8x128xi32>
    %34 = arith.cmpi eq, %0, %33 : vector<8x128xi32>
    %35 = arith.extui %34 : vector<8x128xi1> to vector<8x128xi32>
    %36 = arith.addi %31, %35 : vector<8x128xi32>
    %c7 = arith.constant 7 : index
    %c0_9 = arith.constant 0 : index
    %37 = vector.load %arg1[%c7, %c0_9] : memref<32x128xi32, #tpu.memory_space<vmem>>, vector<1x128xi32>
    %38 = vector.broadcast %37 : vector<1x128xi32> to vector<8x128xi32>
    %39 = arith.cmpi eq, %0, %38 : vector<8x128xi32>
    %40 = arith.extui %39 : vector<8x128xi1> to vector<8x128xi32>
    %41 = arith.addi %36, %40 : vector<8x128xi32>
    %c8 = arith.constant 8 : index
    %c0_10 = arith.constant 0 : index
    %42 = vector.load %arg1[%c8, %c0_10] : memref<32x128xi32, #tpu.memory_space<vmem>>, vector<1x128xi32>
    %43 = vector.broadcast %42 : vector<1x128xi32> to vector<8x128xi32>
    %44 = arith.cmpi eq, %0, %43 : vector<8x128xi32>
    %45 = arith.extui %44 : vector<8x128xi1> to vector<8x128xi32>
    %46 = arith.addi %41, %45 : vector<8x128xi32>
    %c9 = arith.constant 9 : index
    %c0_11 = arith.constant 0 : index
    %47 = vector.load %arg1[%c9, %c0_11] : memref<32x128xi32, #tpu.memory_space<vmem>>, vector<1x128xi32>
    %48 = vector.broadcast %47 : vector<1x128xi32> to vector<8x128xi32>
    %49 = arith.cmpi eq, %0, %48 : vector<8x128xi32>
    %50 = arith.extui %49 : vector<8x128xi1> to vector<8x128xi32>
    %51 = arith.addi %46, %50 : vector<8x128xi32>
    %c10 = arith.constant 10 : index
    %c0_12 = arith.constant 0 : index
    %52 = vector.load %arg1[%c10, %c0_12] : memref<32x128xi32, #tpu.memory_space<vmem>>, vector<1x128xi32>
    %53 = vector.broadcast %52 : vector<1x128xi32> to vector<8x128xi32>
    %54 = arith.cmpi eq, %0, %53 : vector<8x128xi32>
    %55 = arith.extui %54 : vector<8x128xi1> to vector<8x128xi32>
    %56 = arith.addi %51, %55 : vector<8x128xi32>
    %c11 = arith.constant 11 : index
    %c0_13 = arith.constant 0 : index
    %57 = vector.load %arg1[%c11, %c0_13] : memref<32x128xi32, #tpu.memory_space<vmem>>, vector<1x128xi32>
    %58 = vector.broadcast %57 : vector<1x128xi32> to vector<8x128xi32>
    %59 = arith.cmpi eq, %0, %58 : vector<8x128xi32>
    %60 = arith.extui %59 : vector<8x128xi1> to vector<8x128xi32>
    %61 = arith.addi %56, %60 : vector<8x128xi32>
    %c12 = arith.constant 12 : index
    %c0_14 = arith.constant 0 : index
    %62 = vector.load %arg1[%c12, %c0_14] : memref<32x128xi32, #tpu.memory_space<vmem>>, vector<1x128xi32>
    %63 = vector.broadcast %62 : vector<1x128xi32> to vector<8x128xi32>
    %64 = arith.cmpi eq, %0, %63 : vector<8x128xi32>
    %65 = arith.extui %64 : vector<8x128xi1> to vector<8x128xi32>
    %66 = arith.addi %61, %65 : vector<8x128xi32>
    %c13 = arith.constant 13 : index
    %c0_15 = arith.constant 0 : index
    %67 = vector.load %arg1[%c13, %c0_15] : memref<32x128xi32, #tpu.memory_space<vmem>>, vector<1x128xi32>
    %68 = vector.broadcast %67 : vector<1x128xi32> to vector<8x128xi32>
    %69 = arith.cmpi eq, %0, %68 : vector<8x128xi32>
    %70 = arith.extui %69 : vector<8x128xi1> to vector<8x128xi32>
    %71 = arith.addi %66, %70 : vector<8x128xi32>
    %c14 = arith.constant 14 : index
    %c0_16 = arith.constant 0 : index
    %72 = vector.load %arg1[%c14, %c0_16] : memref<32x128xi32, #tpu.memory_space<vmem>>, vector<1x128xi32>
    %73 = vector.broadcast %72 : vector<1x128xi32> to vector<8x128xi32>
    %74 = arith.cmpi eq, %0, %73 : vector<8x128xi32>
    %75 = arith.extui %74 : vector<8x128xi1> to vector<8x128xi32>
    %76 = arith.addi %71, %75 : vector<8x128xi32>
    %c15 = arith.constant 15 : index
    %c0_17 = arith.constant 0 : index
    %77 = vector.load %arg1[%c15, %c0_17] : memref<32x128xi32, #tpu.memory_space<vmem>>, vector<1x128xi32>
    %78 = vector.broadcast %77 : vector<1x128xi32> to vector<8x128xi32>
    %79 = arith.cmpi eq, %0, %78 : vector<8x128xi32>
    %80 = arith.extui %79 : vector<8x128xi1> to vector<8x128xi32>
    %81 = arith.addi %76, %80 : vector<8x128xi32>
    %c16 = arith.constant 16 : index
    %c0_18 = arith.constant 0 : index
    %82 = vector.load %arg1[%c16, %c0_18] : memref<32x128xi32, #tpu.memory_space<vmem>>, vector<1x128xi32>
    %83 = vector.broadcast %82 : vector<1x128xi32> to vector<8x128xi32>
    %84 = arith.cmpi eq, %0, %83 : vector<8x128xi32>
    %85 = arith.extui %84 : vector<8x128xi1> to vector<8x128xi32>
    %86 = arith.addi %81, %85 : vector<8x128xi32>
    %c17 = arith.constant 17 : index
    %c0_19 = arith.constant 0 : index
    %87 = vector.load %arg1[%c17, %c0_19] : memref<32x128xi32, #tpu.memory_space<vmem>>, vector<1x128xi32>
    %88 = vector.broadcast %87 : vector<1x128xi32> to vector<8x128xi32>
    %89 = arith.cmpi eq, %0, %88 : vector<8x128xi32>
    %90 = arith.extui %89 : vector<8x128xi1> to vector<8x128xi32>
    %91 = arith.addi %86, %90 : vector<8x128xi32>
    %c18 = arith.constant 18 : index
    %c0_20 = arith.constant 0 : index
    %92 = vector.load %arg1[%c18, %c0_20] : memref<32x128xi32, #tpu.memory_space<vmem>>, vector<1x128xi32>
    %93 = vector.broadcast %92 : vector<1x128xi32> to vector<8x128xi32>
    %94 = arith.cmpi eq, %0, %93 : vector<8x128xi32>
    %95 = arith.extui %94 : vector<8x128xi1> to vector<8x128xi32>
    %96 = arith.addi %91, %95 : vector<8x128xi32>
    %c19 = arith.constant 19 : index
    %c0_21 = arith.constant 0 : index
    %97 = vector.load %arg1[%c19, %c0_21] : memref<32x128xi32, #tpu.memory_space<vmem>>, vector<1x128xi32>
    %98 = vector.broadcast %97 : vector<1x128xi32> to vector<8x128xi32>
    %99 = arith.cmpi eq, %0, %98 : vector<8x128xi32>
    %100 = arith.extui %99 : vector<8x128xi1> to vector<8x128xi32>
    %101 = arith.addi %96, %100 : vector<8x128xi32>
    %c20 = arith.constant 20 : index
    %c0_22 = arith.constant 0 : index
    %102 = vector.load %arg1[%c20, %c0_22] : memref<32x128xi32, #tpu.memory_space<vmem>>, vector<1x128xi32>
    %103 = vector.broadcast %102 : vector<1x128xi32> to vector<8x128xi32>
    %104 = arith.cmpi eq, %0, %103 : vector<8x128xi32>
    %105 = arith.extui %104 : vector<8x128xi1> to vector<8x128xi32>
    %106 = arith.addi %101, %105 : vector<8x128xi32>
    %c21 = arith.constant 21 : index
    %c0_23 = arith.constant 0 : index
    %107 = vector.load %arg1[%c21, %c0_23] : memref<32x128xi32, #tpu.memory_space<vmem>>, vector<1x128xi32>
    %108 = vector.broadcast %107 : vector<1x128xi32> to vector<8x128xi32>
    %109 = arith.cmpi eq, %0, %108 : vector<8x128xi32>
    %110 = arith.extui %109 : vector<8x128xi1> to vector<8x128xi32>
    %111 = arith.addi %106, %110 : vector<8x128xi32>
    %c22 = arith.constant 22 : index
    %c0_24 = arith.constant 0 : index
    %112 = vector.load %arg1[%c22, %c0_24] : memref<32x128xi32, #tpu.memory_space<vmem>>, vector<1x128xi32>
    %113 = vector.broadcast %112 : vector<1x128xi32> to vector<8x128xi32>
    %114 = arith.cmpi eq, %0, %113 : vector<8x128xi32>
    %115 = arith.extui %114 : vector<8x128xi1> to vector<8x128xi32>
    %116 = arith.addi %111, %115 : vector<8x128xi32>
    %c23 = arith.constant 23 : index
    %c0_25 = arith.constant 0 : index
    %117 = vector.load %arg1[%c23, %c0_25] : memref<32x128xi32, #tpu.memory_space<vmem>>, vector<1x128xi32>
    %118 = vector.broadcast %117 : vector<1x128xi32> to vector<8x128xi32>
    %119 = arith.cmpi eq, %0, %118 : vector<8x128xi32>
    %120 = arith.extui %119 : vector<8x128xi1> to vector<8x128xi32>
    %121 = arith.addi %116, %120 : vector<8x128xi32>
    %c24 = arith.constant 24 : index
    %c0_26 = arith.constant 0 : index
    %122 = vector.load %arg1[%c24, %c0_26] : memref<32x128xi32, #tpu.memory_space<vmem>>, vector<1x128xi32>
    %123 = vector.broadcast %122 : vector<1x128xi32> to vector<8x128xi32>
    %124 = arith.cmpi eq, %0, %123 : vector<8x128xi32>
    %125 = arith.extui %124 : vector<8x128xi1> to vector<8x128xi32>
    %126 = arith.addi %121, %125 : vector<8x128xi32>
    %c25 = arith.constant 25 : index
    %c0_27 = arith.constant 0 : index
    %127 = vector.load %arg1[%c25, %c0_27] : memref<32x128xi32, #tpu.memory_space<vmem>>, vector<1x128xi32>
    %128 = vector.broadcast %127 : vector<1x128xi32> to vector<8x128xi32>
    %129 = arith.cmpi eq, %0, %128 : vector<8x128xi32>
    %130 = arith.extui %129 : vector<8x128xi1> to vector<8x128xi32>
    %131 = arith.addi %126, %130 : vector<8x128xi32>
    %c26 = arith.constant 26 : index
    %c0_28 = arith.constant 0 : index
    %132 = vector.load %arg1[%c26, %c0_28] : memref<32x128xi32, #tpu.memory_space<vmem>>, vector<1x128xi32>
    %133 = vector.broadcast %132 : vector<1x128xi32> to vector<8x128xi32>
    %134 = arith.cmpi eq, %0, %133 : vector<8x128xi32>
    %135 = arith.extui %134 : vector<8x128xi1> to vector<8x128xi32>
    %136 = arith.addi %131, %135 : vector<8x128xi32>
    %c27 = arith.constant 27 : index
    %c0_29 = arith.constant 0 : index
    %137 = vector.load %arg1[%c27, %c0_29] : memref<32x128xi32, #tpu.memory_space<vmem>>, vector<1x128xi32>
    %138 = vector.broadcast %137 : vector<1x128xi32> to vector<8x128xi32>
    %139 = arith.cmpi eq, %0, %138 : vector<8x128xi32>
    %140 = arith.extui %139 : vector<8x128xi1> to vector<8x128xi32>
    %141 = arith.addi %136, %140 : vector<8x128xi32>
    %c28 = arith.constant 28 : index
    %c0_30 = arith.constant 0 : index
    %142 = vector.load %arg1[%c28, %c0_30] : memref<32x128xi32, #tpu.memory_space<vmem>>, vector<1x128xi32>
    %143 = vector.broadcast %142 : vector<1x128xi32> to vector<8x128xi32>
    %144 = arith.cmpi eq, %0, %143 : vector<8x128xi32>
    %145 = arith.extui %144 : vector<8x128xi1> to vector<8x128xi32>
    %146 = arith.addi %141, %145 : vector<8x128xi32>
    %c29 = arith.constant 29 : index
    %c0_31 = arith.constant 0 : index
    %147 = vector.load %arg1[%c29, %c0_31] : memref<32x128xi32, #tpu.memory_space<vmem>>, vector<1x128xi32>
    %148 = vector.broadcast %147 : vector<1x128xi32> to vector<8x128xi32>
    %149 = arith.cmpi eq, %0, %148 : vector<8x128xi32>
    %150 = arith.extui %149 : vector<8x128xi1> to vector<8x128xi32>
    %151 = arith.addi %146, %150 : vector<8x128xi32>
    %c30 = arith.constant 30 : index
    %c0_32 = arith.constant 0 : index
    %152 = vector.load %arg1[%c30, %c0_32] : memref<32x128xi32, #tpu.memory_space<vmem>>, vector<1x128xi32>
    %153 = vector.broadcast %152 : vector<1x128xi32> to vector<8x128xi32>
    %154 = arith.cmpi eq, %0, %153 : vector<8x128xi32>
    %155 = arith.extui %154 : vector<8x128xi1> to vector<8x128xi32>
    %156 = arith.addi %151, %155 : vector<8x128xi32>
    %c31 = arith.constant 31 : index
    %c0_33 = arith.constant 0 : index
    %157 = vector.load %arg1[%c31, %c0_33] : memref<32x128xi32, #tpu.memory_space<vmem>>, vector<1x128xi32>
    %158 = vector.broadcast %157 : vector<1x128xi32> to vector<8x128xi32>
    %159 = arith.cmpi eq, %0, %158 : vector<8x128xi32>
    %160 = arith.extui %159 : vector<8x128xi1> to vector<8x128xi32>
    %161 = arith.addi %156, %160 : vector<8x128xi32>
    %c0_i32_34 = arith.constant 0 : i32
    %162 = vector.broadcast %c0_i32_34 : i32 to vector<8x128xi32>
    %163 = arith.cmpi eq, %161, %162 : vector<8x128xi32>
    %164 = arith.extui %163 : vector<8x128xi1> to vector<8x128xi32>
    %165 = arith.sitofp %164 : vector<8x128xi32> to vector<8x128xf32>
    %cst = arith.constant dense<0.000000e+00> : vector<128xf32>
    %166 = vector.multi_reduction <add>, %165, %cst [0] : vector<8x128xf32> to vector<128xf32>
    %167 = vector.shape_cast %166 : vector<128xf32> to vector<1x128xf32>
    %cst_35 = arith.constant 1.250000e-01 : f32
    %168 = vector.broadcast %cst_35 : f32 to vector<1x128xf32>
    %169 = arith.mulf %167, %168 : vector<1x128xf32>
    %c0_36 = arith.constant 0 : index
    %c0_37 = arith.constant 0 : index
    %170 = vector.load %arg3[%c0_36, %c0_37] : memref<1x128xf32, #tpu.memory_space<vmem>>, vector<1x128xf32>
    tpu.vector_store %arg3[%c0_36, %c0_37], %169 {strides = array<i32>} : memref<1x128xf32, #tpu.memory_space<vmem>>, vector<1x128xf32>,
    return
  }
  func.func @transform_0(%arg0: i32) -> (i32, i32) {
    %c0_i32 = arith.constant 0 : i32
    %c0_i32_0 = arith.constant 0 : i32
    return %c0_i32, %arg0 : i32, i32
  }
  func.func @transform_1(%arg0: i32) -> (i32, i32) {
    %c0_i32 = arith.constant 0 : i32
    %c0_i32_0 = arith.constant 0 : i32
    return %c0_i32, %arg0 : i32, i32
  }
  func.func @transform_2(%arg0: i32) -> (i32, i32) {
    %c0_i32 = arith.constant 0 : i32
    %c0_i32_0 = arith.constant 0 : i32
    return %c0_i32, %arg0 : i32, i32
  }
}

</mosaic_0001>

<llo_original>
// kernel: tpu_custom_call.1
$region0: #{tpu_custom_call.1}
  #allocation0 [shape = 'u32[]', space=smem, size = 0x4, offset = 0x4, fixed_abs, tag = 'smem constant byte address 0x4 - core index']
  #allocation1 [shape = 'u32[144,128]{1,0:T(1,128)}', space=vmem, size = 0x12000, scoped, tag = 'internal scratch']
  %s0 = inlined_call_operand.hbm [shape: s32[32,128], index: 0, kind: input, shape index: {}]
  %s1 = inlined_call_operand.hbm [shape: s32[8,128], index: 1, kind: input, shape index: {}]
  %s2 = inlined_call_operand.hbm [shape: f32[1,128], index: 2, kind: output, shape index: {}]
  %s3 = sld [smem:[#allocation0]]
  $region26: #{tpu_custom_call.1} parent=0
    _
  %s5 = ssub.s32 1, %s3
  %s6 = scalar_select 0, %s5, %s3
  $region1: #{tpu_custom_call.1} parent=0
    #allocation2 [shape = 'u8[16384]{0}', space=vmem, size = 0x4000, scoped, tag = 'input window, operand 0, single buffered']
    #allocation3 [shape = 's32[1]{0}', space=sflag, size = 0x4, scoped, tag = 'scoped memory for tpu_custom_call.1']
    #allocation4 [shape = 's32[1]{0}', space=sflag, size = 0x4, scoped, tag = 'scoped memory for tpu_custom_call.1']
    #allocation5 [shape = 'u8[4096]{0}', space=vmem, size = 0x1000, scoped, tag = 'input window, operand 1, single buffered']
    #allocation6 [shape = 's32[1]{0}', space=sflag, size = 0x4, scoped, tag = 'scoped memory for tpu_custom_call.1']
    #allocation7 [shape = 'u8[512]{0}', space=vmem, size = 0x400, scoped, tag = 'output window, operand 0, single buffered']
    %7 = vsyncpa [#allocation3], 0
    %8 = vsyncpa [#allocation6], 0
    %9 = vsyncpa [#allocation4], 0
    // Predicated region
    $region2: #{tpu_custom_call.1} parent=1 // pred_check
      _
    $region3: #{tpu_custom_call.1} parent=1 // pred_check_branch
      %11 = sbr.rel (0) target = $region5
    $region4: #{tpu_custom_call.1} parent=1 // pred_region
      %s13 = ssub.s32 512, 512
      %14 = vsyncadd [#allocation3], %s13
      %s15 = sshll.u32 [#allocation2], 4
      %s16 = int_to_ptr.vmem [resolvable:$true] %s15
      %21 = dma.hbm_to_vmem [thread:$0]  %s0, 512, %s16, [#allocation3], 128, 128, 8
    $region5: #{tpu_custom_call.1} parent=1 // pred_fallthru
      _
    // Predicated region
    $region6: #{tpu_custom_call.1} parent=1 // pred_check
      _
    $region7: #{tpu_custom_call.1} parent=1 // pred_check_branch
      %23 = sbr.rel (0) target = $region9
    $region8: #{tpu_custom_call.1} parent=1 // pred_region
      %s25 = ssub.s32 128, 128
      %26 = vsyncadd [#allocation6], %s25
      %s28 = sshll.u32 [#allocation5], 4
      %s29 = int_to_ptr.vmem [resolvable:$true] %s28
      %31 = dma.hbm_to_vmem [thread:$0]  %s1, 128, %s29, [#allocation6]
    $region9: #{tpu_custom_call.1} parent=1 // pred_fallthru
      _
    // Predicated region
    $region10: #{tpu_custom_call.1} parent=1 // pred_check
      _
    $region11: #{tpu_custom_call.1} parent=1 // pred_check_branch
      %33 = sbr.rel (0) target = $region13
    $region12: #{tpu_custom_call.1} parent=1 // pred_region
      %34 = dma.done [#allocation3], 512
    $region13: #{tpu_custom_call.1} parent=1 // pred_fallthru
      _
    // Predicated region
    $region14: #{tpu_custom_call.1} parent=1 // pred_check
      _
    $region15: #{tpu_custom_call.1} parent=1 // pred_check_branch
      %36 = sbr.rel (0) target = $region17
    $region16: #{tpu_custom_call.1} parent=1 // pred_region
      %37 = dma.done [#allocation6], 128
    $region17: #{tpu_custom_call.1} parent=1 // pred_fallthru
      _
    %v38 = vld [vmem:[#allocation5] sm:$0xff]
    %v39 = vld [vmem:[#allocation2] sm:$0x1]
    %v40 = vlaneseq
    %v41 = vshrl.u32 %v40, 7
    %v42 = vsub.s32 0, %v41
    %v43 = vrot.slane %v39, %v42
    %vm44 = vcmp.eq.s32.totalorder %v38, %v43
    %v45 = vsel %vm44, 1, 0
    %v46 = vld [vmem:[#allocation2 + $0x1] sm:$0x1]
    %v47 = vlaneseq
    %v48 = vshrl.u32 %v47, 7
    %v49 = vsub.s32 0, %v48
    %v50 = vrot.slane %v46, %v49
    %vm51 = vcmp.eq.s32.totalorder %v38, %v50
    %v52 = vsel %vm51, 1, 0
    %v53 = vadd.s32 %v45, %v52
    %v54 = vld [vmem:[#allocation2 + $0x2] sm:$0x1]
    %v55 = vlaneseq
    %v56 = vshrl.u32 %v55, 7
    %v57 = vsub.s32 0, %v56
    %v58 = vrot.slane %v54, %v57
    %vm59 = vcmp.eq.s32.totalorder %v38, %v58
    %v60 = vsel %vm59, 1, 0
    %v61 = vadd.s32 %v53, %v60
    %v62 = vld [vmem:[#allocation2 + $0x3] sm:$0x1]
    %v63 = vlaneseq
    %v64 = vshrl.u32 %v63, 7
    %v65 = vsub.s32 0, %v64
    %v66 = vrot.slane %v62, %v65
    %vm67 = vcmp.eq.s32.totalorder %v38, %v66
    %v68 = vsel %vm67, 1, 0
    %v69 = vadd.s32 %v61, %v68
    %v70 = vld [vmem:[#allocation2 + $0x4] sm:$0x1]
    %v71 = vlaneseq
    %v72 = vshrl.u32 %v71, 7
    %v73 = vsub.s32 0, %v72
    %v74 = vrot.slane %v70, %v73
    %vm75 = vcmp.eq.s32.totalorder %v38, %v74
    %v76 = vsel %vm75, 1, 0
    %v77 = vadd.s32 %v69, %v76
    %v78 = vld [vmem:[#allocation2 + $0x5] sm:$0x1]
    %v79 = vlaneseq
    %v80 = vshrl.u32 %v79, 7
    %v81 = vsub.s32 0, %v80
    %v82 = vrot.slane %v78, %v81
    %vm83 = vcmp.eq.s32.totalorder %v38, %v82
    %v84 = vsel %vm83, 1, 0
    %v85 = vadd.s32 %v77, %v84
    %v86 = vld [vmem:[#allocation2 + $0x6] sm:$0x1]
    %v87 = vlaneseq
    %v88 = vshrl.u32 %v87, 7
    %v89 = vsub.s32 0, %v88
    %v90 = vrot.slane %v86, %v89
    %vm91 = vcmp.eq.s32.totalorder %v38, %v90
    %v92 = vsel %vm91, 1, 0
    %v93 = vadd.s32 %v85, %v92
    %v94 = vld [vmem:[#allocation2 + $0x7] sm:$0x1]
    %v95 = vlaneseq
    %v96 = vshrl.u32 %v95, 7
    %v97 = vsub.s32 0, %v96
    %v98 = vrot.slane %v94, %v97
    %vm99 = vcmp.eq.s32.totalorder %v38, %v98
    %v100 = vsel %vm99, 1, 0
    %v101 = vadd.s32 %v93, %v100
    %v102 = vld [vmem:[#allocation2 + $0x8] sm:$0x1]
    %v103 = vlaneseq
    %v104 = vshrl.u32 %v103, 7
    %v105 = vsub.s32 0, %v104
    %v106 = vrot.slane %v102, %v105
    %vm107 = vcmp.eq.s32.totalorder %v38, %v106
    %v108 = vsel %vm107, 1, 0
    %v109 = vadd.s32 %v101, %v108
    %v110 = vld [vmem:[#allocation2 + $0x9] sm:$0x1]
    %v111 = vlaneseq
    %v112 = vshrl.u32 %v111, 7
    %v113 = vsub.s32 0, %v112
    %v114 = vrot.slane %v110, %v113
    %vm115 = vcmp.eq.s32.totalorder %v38, %v114
    %v116 = vsel %vm115, 1, 0
    %v117 = vadd.s32 %v109, %v116
    %v118 = vld [vmem:[#allocation2 + $0xa] sm:$0x1]
    %v119 = vlaneseq
    %v120 = vshrl.u32 %v119, 7
    %v121 = vsub.s32 0, %v120
    %v122 = vrot.slane %v118, %v121
    %vm123 = vcmp.eq.s32.totalorder %v38, %v122
    %v124 = vsel %vm123, 1, 0
    %v125 = vadd.s32 %v117, %v124
    %v126 = vld [vmem:[#allocation2 + $0xb] sm:$0x1]
    %v127 = vlaneseq
    %v128 = vshrl.u32 %v127, 7
    %v129 = vsub.s32 0, %v128
    %v130 = vrot.slane %v126, %v129
    %vm131 = vcmp.eq.s32.totalorder %v38, %v130
    %v132 = vsel %vm131, 1, 0
    %v133 = vadd.s32 %v125, %v132
    %v134 = vld [vmem:[#allocation2 + $0xc] sm:$0x1]
    %v135 = vlaneseq
    %v136 = vshrl.u32 %v135, 7
    %v137 = vsub.s32 0, %v136
    %v138 = vrot.slane %v134, %v137
    %vm139 = vcmp.eq.s32.totalorder %v38, %v138
    %v140 = vsel %vm139, 1, 0
    %v141 = vadd.s32 %v133, %v140
    %v142 = vld [vmem:[#allocation2 + $0xd] sm:$0x1]
    %v143 = vlaneseq
    %v144 = vshrl.u32 %v143, 7
    %v145 = vsub.s32 0, %v144
    %v146 = vrot.slane %v142, %v145
    %vm147 = vcmp.eq.s32.totalorder %v38, %v146
    %v148 = vsel %vm147, 1, 0
    %v149 = vadd.s32 %v141, %v148
    %v150 = vld [vmem:[#allocation2 + $0xe] sm:$0x1]
    %v151 = vlaneseq
    %v152 = vshrl.u32 %v151, 7
    %v153 = vsub.s32 0, %v152
    %v154 = vrot.slane %v150, %v153
    %vm155 = vcmp.eq.s32.totalorder %v38, %v154
    %v156 = vsel %vm155, 1, 0
    %v157 = vadd.s32 %v149, %v156
    %v158 = vld [vmem:[#allocation2 + $0xf] sm:$0x1]
    %v159 = vlaneseq
    %v160 = vshrl.u32 %v159, 7
    %v161 = vsub.s32 0, %v160
    %v162 = vrot.slane %v158, %v161
    %vm163 = vcmp.eq.s32.totalorder %v38, %v162
    %v164 = vsel %vm163, 1, 0
    %v165 = vadd.s32 %v157, %v164
    %v166 = vld [vmem:[#allocation2 + $0x10] sm:$0x1]
    %v167 = vlaneseq
    %v168 = vshrl.u32 %v167, 7
    %v169 = vsub.s32 0, %v168
    %v170 = vrot.slane %v166, %v169
    %vm171 = vcmp.eq.s32.totalorder %v38, %v170
    %v172 = vsel %vm171, 1, 0
    %v173 = vadd.s32 %v165, %v172
    %v174 = vld [vmem:[#allocation2 + $0x11] sm:$0x1]
    %v175 = vlaneseq
    %v176 = vshrl.u32 %v175, 7
    %v177 = vsub.s32 0, %v176
    %v178 = vrot.slane %v174, %v177
    %vm179 = vcmp.eq.s32.totalorder %v38, %v178
    %v180 = vsel %vm179, 1, 0
    %v181 = vadd.s32 %v173, %v180
    %v182 = vld [vmem:[#allocation2 + $0x12] sm:$0x1]
    %v183 = vlaneseq
    %v184 = vshrl.u32 %v183, 7
    %v185 = vsub.s32 0, %v184
    %v186 = vrot.slane %v182, %v185
    %vm187 = vcmp.eq.s32.totalorder %v38, %v186
    %v188 = vsel %vm187, 1, 0
    %v189 = vadd.s32 %v181, %v188
    %v190 = vld [vmem:[#allocation2 + $0x13] sm:$0x1]
    %v191 = vlaneseq
    %v192 = vshrl.u32 %v191, 7
    %v193 = vsub.s32 0, %v192
    %v194 = vrot.slane %v190, %v193
    %vm195 = vcmp.eq.s32.totalorder %v38, %v194
    %v196 = vsel %vm195, 1, 0
    %v197 = vadd.s32 %v189, %v196
    %v198 = vld [vmem:[#allocation2 + $0x14] sm:$0x1]
    %v199 = vlaneseq
    %v200 = vshrl.u32 %v199, 7
    %v201 = vsub.s32 0, %v200
    %v202 = vrot.slane %v198, %v201
    %vm203 = vcmp.eq.s32.totalorder %v38, %v202
    %v204 = vsel %vm203, 1, 0
    %v205 = vadd.s32 %v197, %v204
    %v206 = vld [vmem:[#allocation2 + $0x15] sm:$0x1]
    %v207 = vlaneseq
    %v208 = vshrl.u32 %v207, 7
    %v209 = vsub.s32 0, %v208
    %v210 = vrot.slane %v206, %v209
    %vm211 = vcmp.eq.s32.totalorder %v38, %v210
    %v212 = vsel %vm211, 1, 0
    %v213 = vadd.s32 %v205, %v212
    %v214 = vld [vmem:[#allocation2 + $0x16] sm:$0x1]
    %v215 = vlaneseq
    %v216 = vshrl.u32 %v215, 7
    %v217 = vsub.s32 0, %v216
    %v218 = vrot.slane %v214, %v217
    %vm219 = vcmp.eq.s32.totalorder %v38, %v218
    %v220 = vsel %vm219, 1, 0
    %v221 = vadd.s32 %v213, %v220
    %v222 = vld [vmem:[#allocation2 + $0x17] sm:$0x1]
    %v223 = vlaneseq
    %v224 = vshrl.u32 %v223, 7
    %v225 = vsub.s32 0, %v224
    %v226 = vrot.slane %v222, %v225
    %vm227 = vcmp.eq.s32.totalorder %v38, %v226
    %v228 = vsel %vm227, 1, 0
    %v229 = vadd.s32 %v221, %v228
    %v230 = vld [vmem:[#allocation2 + $0x18] sm:$0x1]
    %v231 = vlaneseq
    %v232 = vshrl.u32 %v231, 7
    %v233 = vsub.s32 0, %v232
    %v234 = vrot.slane %v230, %v233
    %vm235 = vcmp.eq.s32.totalorder %v38, %v234
    %v236 = vsel %vm235, 1, 0
    %v237 = vadd.s32 %v229, %v236
    %v238 = vld [vmem:[#allocation2 + $0x19] sm:$0x1]
    %v239 = vlaneseq
    %v240 = vshrl.u32 %v239, 7
    %v241 = vsub.s32 0, %v240
    %v242 = vrot.slane %v238, %v241
    %vm243 = vcmp.eq.s32.totalorder %v38, %v242
    %v244 = vsel %vm243, 1, 0
    %v245 = vadd.s32 %v237, %v244
    %v246 = vld [vmem:[#allocation2 + $0x1a] sm:$0x1]
    %v247 = vlaneseq
    %v248 = vshrl.u32 %v247, 7
    %v249 = vsub.s32 0, %v248
    %v250 = vrot.slane %v246, %v249
    %vm251 = vcmp.eq.s32.totalorder %v38, %v250
    %v252 = vsel %vm251, 1, 0
    %v253 = vadd.s32 %v245, %v252
    %v254 = vld [vmem:[#allocation2 + $0x1b] sm:$0x1]
    %v255 = vlaneseq
    %v256 = vshrl.u32 %v255, 7
    %v257 = vsub.s32 0, %v256
    %v258 = vrot.slane %v254, %v257
    %vm259 = vcmp.eq.s32.totalorder %v38, %v258
    %v260 = vsel %vm259, 1, 0
    %v261 = vadd.s32 %v253, %v260
    %v262 = vld [vmem:[#allocation2 + $0x1c] sm:$0x1]
    %v263 = vlaneseq
    %v264 = vshrl.u32 %v263, 7
    %v265 = vsub.s32 0, %v264
    %v266 = vrot.slane %v262, %v265
    %vm267 = vcmp.eq.s32.totalorder %v38, %v266
    %v268 = vsel %vm267, 1, 0
    %v269 = vadd.s32 %v261, %v268
    %v270 = vld [vmem:[#allocation2 + $0x1d] sm:$0x1]
    %v271 = vlaneseq
    %v272 = vshrl.u32 %v271, 7
    %v273 = vsub.s32 0, %v272
    %v274 = vrot.slane %v270, %v273
    %vm275 = vcmp.eq.s32.totalorder %v38, %v274
    %v276 = vsel %vm275, 1, 0
    %v277 = vadd.s32 %v269, %v276
    %v278 = vld [vmem:[#allocation2 + $0x1e] sm:$0x1]
    %v279 = vlaneseq
    %v280 = vshrl.u32 %v279, 7
    %v281 = vsub.s32 0, %v280
    %v282 = vrot.slane %v278, %v281
    %vm283 = vcmp.eq.s32.totalorder %v38, %v282
    %v284 = vsel %vm283, 1, 0
    %v285 = vadd.s32 %v277, %v284
    %v286 = vld [vmem:[#allocation2 + $0x1f] sm:$0x1]
    %v287 = vlaneseq
    %v288 = vshrl.u32 %v287, 7
    %v289 = vsub.s32 0, %v288
    %v290 = vrot.slane %v286, %v289
    %vm291 = vcmp.eq.s32.totalorder %v38, %v290
    %v292 = vsel %vm291, 1, 0
    %v293 = vadd.s32 %v285, %v292
    %vm294 = vcmp.eq.s32.totalorder %v293, 0
    %v295 = vsel %vm294, 1, 0
    %v296 = vcvt.s32.f32 %v295
    %v297 = vrot.slane %v296, 4
    %v298 = vadd.f32 %v296, %v297
    %v299 = vrot.slane %v298, 2
    %v300 = vadd.f32 %v298, %v299
    %v301 = vrot.slane %v300, 1
    %v302 = vadd.f32 %v300, %v301
    %v303 = vmul.f32 %v302, 0.125
    %304 = vst [vmem:[#allocation7] sm:$0x1] %v303
    // Predicated region
    $region18: #{tpu_custom_call.1} parent=1 // pred_check
      _
    $region19: #{tpu_custom_call.1} parent=1 // pred_check_branch
      %306 = sbr.rel (0) target = $region21
    $region20: #{tpu_custom_call.1} parent=1 // pred_region
      %s308 = ssub.s32 16, 16
      %309 = vsyncadd [#allocation4], %s308
      %s311 = sshll.u32 [#allocation7], 4
      %s312 = int_to_ptr.vmem [resolvable:$true] %s311
      %314 = dma.vmem_to_hbm [thread:$0]  %s312, 16, %s2, [#allocation4]
    $region21: #{tpu_custom_call.1} parent=1 // pred_fallthru
      _
    // Predicated region
    $region22: #{tpu_custom_call.1} parent=1 // pred_check
      _
    $region23: #{tpu_custom_call.1} parent=1 // pred_check_branch
      %316 = sbr.rel (0) target = $region25
    $region24: #{tpu_custom_call.1} parent=1 // pred_region
      %317 = dma.done [#allocation4], 16
    $region25: #{tpu_custom_call.1} parent=1 // pred_fallthru
      _
    %318 = vsyncpa [#allocation3], 1
    %319 = vsyncpa [#allocation6], 1
    %320 = vsyncpa [#allocation4], 1

</llo_original>
